<compile_context>
chip_gen: v7x
topology: tpu7x:2x2x1
jax: 0.10.0
libtpu: 0.0.40
codegen_flags: <defaults>
</compile_context>

<pallas_src>
import functools

import jax
import jax.numpy as jnp
from jax.experimental import pallas as pl
from jax.experimental.pallas import tpu as pltpu


def _affine_sample_kernel(theta_ref, base_ref, src_ref, out_ref, *,
                          H, W, Hp, C, NB, TP):
    """One grid step == NB batch elements x one output-pixel tile.

    theta_ref : (N*6,) f32 SMEM, pre-normalized [t00,t01,t02/H,t10,t11,t12/W]*N
    base_ref  : (2, TP) f32 VMEM block: row 0 = ys, row 1 = xs (normalized
                output-pixel-center coords for this pixel tile)
    src_ref   : (NB, C*Hp, W) VMEM block (zero-row-padded source per batch elem)
    out_ref   : (NB, C, TP)  VMEM block
    """
    fH, fW = float(H), float(W)
    bt = pl.program_id(0)

    ys = base_ref[0:1, :]   # (1, TP)
    xs = base_ref[1:2, :]   # (1, TP)

    # Hoisted source column / row indices (float compare, no int casts).
    qx = jax.lax.broadcasted_iota(jnp.int32, (W, TP), 0).astype(jnp.float32)
    qy = jax.lax.broadcasted_iota(jnp.int32, (Hp, TP), 0).astype(jnp.float32)

    def body(i, carry):
        n = bt * NB + i
        t00 = theta_ref[n * 6 + 0]
        t01 = theta_ref[n * 6 + 1]
        t02 = theta_ref[n * 6 + 2]
        t10 = theta_ref[n * 6 + 3]
        t11 = theta_ref[n * 6 + 4]
        t12 = theta_ref[n * 6 + 5]

        # grid = theta @ [x, y, 1]  (theta already divided by the norm matrix).
        gx = t00 * xs + t01 * ys + t02          # (1, TP)
        gy = t10 * xs + t11 * ys + t12

        # grid_sample unnormalize (align_corners=False).
        ix = ((gx + 1.0) * fW - 1.0) * 0.5
        iy = ((gy + 1.0) * fH - 1.0) * 0.5

        x0 = jnp.floor(ix)
        y0 = jnp.floor(iy)
        fx = ix - x0
        fy = iy - y0

        # Per-side validity (zeros padding): out-of-bounds corners get w = 0.
        vx0 = (x0 >= 0.0) & (x0 <= fW - 1.0)
        vx1 = (x0 >= -1.0) & (x0 <= fW - 2.0)   # x0 + 1 in bounds
        vy0 = (y0 >= 0.0) & (y0 <= fH - 1.0)
        vy1 = (y0 >= -1.0) & (y0 <= fH - 2.0)   # y0 + 1 in bounds

        wx0 = jnp.where(vx0, 1.0 - fx, 0.0)     # (1, TP)
        wx1 = jnp.where(vx1, fx, 0.0)
        wy0 = jnp.where(vy0, 1.0 - fy, 0.0)
        wy1 = jnp.where(vy1, fy, 0.0)

        # Separable interpolation matrices (each column has <= 2 nonzeros).
        mx = (jnp.where(qx == x0, wx0, 0.0)
              + jnp.where(qx == x0 + 1.0, wx1, 0.0))    # (W,  TP)
        my = (jnp.where(qy == y0, wy0, 0.0)
              + jnp.where(qy == y0 + 1.0, wy1, 0.0))    # (Hp, TP)

        lhs = src_ref[i]                                # (C*Hp, W)
        if lhs.dtype == jnp.bfloat16:
            # Native bf16 x bf16 -> f32 on the MXU.
            t = jnp.dot(lhs, mx.astype(jnp.bfloat16),
                        preferred_element_type=jnp.float32)
        else:
            if lhs.dtype != jnp.float32:
                lhs = lhs.astype(jnp.float32)
            t = jnp.dot(lhs, mx, preferred_element_type=jnp.float32)

        # t: (C*Hp, TP) f32.  Weighted reduce over the Hp source rows.
        out = jnp.sum(t.reshape(C, Hp, TP) * my[None, :, :], axis=1)  # (C, TP)
        out_ref[i] = out.astype(out_ref.dtype)
        return carry

    if NB <= 2:
        for i in range(NB):       # fully visible to the scheduler, tiny temps
            body(i, 0)
    else:
        jax.lax.fori_loop(0, NB, body, 0)   # bound live ranges for larger NB


def _vmem_capacity_bytes():
    try:
        return int(pltpu.get_tpu_info().vmem_capacity_bytes)
    except Exception:
        return 64 * 1024 * 1024   # conservative (v7x-sized) fallback


def _pick_tp(HWp, per_lane_bytes, cap_bytes, max_tp=2048):
    """Largest multiple of 128 dividing HWp whose TP-proportional VMEM stays
    under cap_bytes (always at least 128)."""
    best = 128
    t = 256
    while t <= min(HWp, max_tp):
        if HWp % t == 0 and t * per_lane_bytes <= cap_bytes:
            best = t
        t += 128
    return best


def _pick_nb(N, src_bytes_per_elem, n_pixel_tiles):
    """Batch elements per grid step: amortize per-step overhead, but keep >= 2
    batch grid steps when the pixel axis offers no megacore parallelism."""
    best = 1
    for nb in range(1, min(N, 8) + 1):
        if N % nb:
            continue
        if N >= 2 and n_pixel_tiles < 2 and N // nb < 2:
            continue
        if nb * src_bytes_per_elem > 2 * 1024 * 1024:
            continue
        best = nb
    return best


def affine_transformer_2d(src, mat, mode='bilinear'):
    """src: (N, C, H, W); mat: (N, 2, 3).  Matches AffineTransformer2D.forward."""
    if mode != 'bilinear':
        raise NotImplementedError("only mode='bilinear' is implemented")

    N, C, H, W = src.shape
    HW = H * W
    HWp = ((HW + 127) // 128) * 128      # output pixels -> lane-dense tiles
    Hp = ((H + 7) // 8) * 8              # source rows   -> sublane-aligned

    # Zero-pad source rows (padded rows can never receive nonzero weight) and
    # collapse (C, Hp) so the kernel's matmul LHS is (C*Hp, W).  The reshapes
    # are free (contiguous); the pad is one cheap HBM pass only when H % 8 != 0.
    src_p = src if Hp == H else jnp.pad(src, ((0, 0), (0, 0), (0, Hp - H), (0, 0)))
    src_r = src_p.reshape(N, C * Hp, W)

    # Pre-normalized, flattened affine params:  mat / [[1,1,H],[1,1,W]].
    mat32 = mat.astype(jnp.float32)
    theta = jnp.stack(
        [mat32[:, 0, 0], mat32[:, 0, 1], mat32[:, 0, 2] / float(H),
         mat32[:, 1, 0], mat32[:, 1, 1], mat32[:, 1, 2] / float(W)],
        axis=-1).reshape(-1)             # (N*6,): tiny 1-D SMEM footprint

    # Normalized output-pixel-center coords (align_corners=False), padded to HWp.
    p = jnp.arange(HWp, dtype=jnp.int32)
    hi = (p // W).astype(jnp.float32)
    wi = (p % W).astype(jnp.float32)
    xs = (2.0 * wi + 1.0) / float(W) - 1.0
    ys = (2.0 * hi + 1.0) / float(H) - 1.0
    base = jnp.stack([ys, xs], axis=0)   # (2, HWp)

    # Generation-aware VMEM budgeting (v7x: 64 MiB per TensorCore).
    vmem_cap = _vmem_capacity_bytes()
    vmem_limit = min(vmem_cap * 3 // 4, 64 * 1024 * 1024)
    tp_cap = 2 * 1024 * 1024 if vmem_cap <= 64 * 1024 * 1024 else 8 * 1024 * 1024

    # Rough per-output-lane f32 footprint of the TP-proportional temporaries
    # (T slab, Mx/My + temps, out/base blocks double-buffered).
    per_lane_bytes = 4 * (2 * C * Hp + 3 * (W + Hp) + 2 * C + 8)
    TP = _pick_tp(HWp, per_lane_bytes, tp_cap)
    NB = _pick_nb(N, C * Hp * W * src.dtype.itemsize, HWp // TP)

    kernel = functools.partial(_affine_sample_kernel,
                               H=H, W=W, Hp=Hp, C=C, NB=NB, TP=TP)
    out_r = pl.pallas_call(
        kernel,
        out_shape=jax.ShapeDtypeStruct((N, C, HWp), src.dtype),
        grid_spec=pl.GridSpec(
            grid=(N // NB, HWp // TP),
            in_specs=[
                pl.BlockSpec(memory_space=pltpu.MemorySpace.SMEM),          # theta
                pl.BlockSpec((2, TP), lambda bt, tp: (0, tp)),              # base
                pl.BlockSpec((NB, C * Hp, W), lambda bt, tp: (bt, 0, 0)),   # src
            ],
            out_specs=pl.BlockSpec((NB, C, TP), lambda bt, tp: (bt, 0, tp)),
        ),
        compiler_params=pltpu.CompilerParams(
            dimension_semantics=("parallel", "parallel"),
            vmem_limit_bytes=int(vmem_limit)),
    )(theta, base, src_r)

    if HWp != HW:
        out_r = out_r[:, :, :HW]
    return out_r.reshape(N, C, H, W)


def reference(src, mat):
    """Pure-JAX reference for affine_grid + grid_sample (bilinear, zeros pad)."""
    N, C, H, W = src.shape
    norm = jnp.array([[1.0, 1.0, float(H)], [1.0, 1.0, float(W)]], jnp.float32)[None]
    theta = mat / norm
    xs = (2.0 * jnp.arange(W, dtype=jnp.float32) + 1.0) / W - 1.0
    ys = (2.0 * jnp.arange(H, dtype=jnp.float32) + 1.0) / H - 1.0
    X = jnp.broadcast_to(xs[None, :], (H, W))
    Y = jnp.broadcast_to(ys[:, None], (H, W))
    gx = theta[:, 0, 0, None, None] * X + theta[:, 0, 1, None, None] * Y + theta[:, 0, 2, None, None]
    gy = theta[:, 1, 0, None, None] * X + theta[:, 1, 1, None, None] * Y + theta[:, 1, 2, None, None]
    ix = ((gx + 1.0) * W - 1.0) * 0.5
    iy = ((gy + 1.0) * H - 1.0) * 0.5
    x0 = jnp.floor(ix); y0 = jnp.floor(iy)
    x1 = x0 + 1.0; y1 = y0 + 1.0

    bidx = jnp.arange(N)[:, None, None, None]
    cidx = jnp.arange(C)[None, :, None, None]

    def gather(yc, xc):
        valid = (xc >= 0) & (xc <= W - 1) & (yc >= 0) & (yc <= H - 1)
        xi = jnp.clip(xc, 0, W - 1).astype(jnp.int32)
        yi = jnp.clip(yc, 0, H - 1).astype(jnp.int32)
        v = src[bidx, cidx, yi[:, None], xi[:, None]]
        return v * valid[:, None].astype(src.dtype)

    w00 = ((x1 - ix) * (y1 - iy))[:, None]
    w01 = ((ix - x0) * (y1 - iy))[:, None]
    w10 = ((x1 - ix) * (iy - y0))[:, None]
    w11 = ((ix - x0) * (iy - y0))[:, None]
    return (gather(y0, x0) * w00 + gather(y0, x1) * w01 +
            gather(y1, x0) * w10 + gather(y1, x1) * w11)


if __name__ == "__main__":
    key = jax.random.PRNGKey(0)
    k1, k2, k3 = jax.random.split(key, 3)

    # Config 1: nominal small shape.
    N, C, H, W = 2, 4, 16, 16
    src = jax.random.normal(k1, (N, C, H, W), dtype=jnp.float32)
    lin = jnp.eye(2, dtype=jnp.float32)[None] + 0.1 * jax.random.normal(
        k2, (N, 2, 2), jnp.float32)
    trans = 2.0 * jax.random.normal(k3, (N, 2, 1), jnp.float32)
    mat = jnp.concatenate([lin, trans], axis=-1)          # (N, 2, 3)

    out = jax.block_until_ready(affine_transformer_2d(src, mat))
    ref = reference(src, mat)
    assert out.shape == (N, C, H, W)
    err = float(jnp.max(jnp.abs(out - ref)))
    assert err < 1e-4, f"max abs err = {err}"

    # Config 2: odd spatial size -> exercises HW->128 lane padding, H->8 row
    # padding and the NB=2 batch loop.
    k4, k5, k6 = jax.random.split(jax.random.PRNGKey(1), 3)
    N2, C2, H2, W2 = 4, 3, 6, 9
    src2 = jax.random.normal(k4, (N2, C2, H2, W2), dtype=jnp.float32)
    lin2 = jnp.eye(2, dtype=jnp.float32)[None] + 0.05 * jax.random.normal(
        k5, (N2, 2, 2), jnp.float32)
    trans2 = jax.random.normal(k6, (N2, 2, 1), jnp.float32)
    mat2 = jnp.concatenate([lin2, trans2], axis=-1)

    out2 = jax.block_until_ready(affine_transformer_2d(src2, mat2))
    ref2 = reference(src2, mat2)
    assert out2.shape == (N2, C2, H2, W2)
    err2 = float(jnp.max(jnp.abs(out2 - ref2)))
    assert err2 < 1e-4, f"max abs err (cfg2) = {err2}"

    print("KERNEL_OK")
</pallas_src>

<mosaic_0001>
module attributes {stable_mosaic.version = 11 : i64} {
  func.func @_affine_sample_kernel(%arg0: i32, %arg1: i32, %arg2: memref<12xf32, #tpu.memory_space<smem>>, %arg3: memref<2x256xf32, #tpu.memory_space<vmem>>, %arg4: memref<1x64x16xf32, #tpu.memory_space<vmem>>, %arg5: memref<1x4x256xf32, #tpu.memory_space<vmem>>) attributes {dimension_semantics = [#tpu.dimension_semantics<parallel>, #tpu.dimension_semantics<parallel>], iteration_bounds = array<i64: 2, 1>, scalar_prefetch = 0 : i64, scratch_operands = 0 : i64, tpu.core_type = #tpu.core_type<tc>, window_params = [{transform_indices = @transform_0, window_bounds = array<i64: 12>}, {transform_indices = @transform_1, window_bounds = array<i64: 2, 256>}, {transform_indices = @transform_2, window_bounds = array<i64: 1, 64, 16>}, {transform_indices = @transform_3, window_bounds = array<i64: 1, 4, 256>}]} {
    %c0 = arith.constant 0 : index
    %c0_0 = arith.constant 0 : index
    %0 = vector.load %arg3[%c0, %c0_0] : memref<2x256xf32, #tpu.memory_space<vmem>>, vector<1x256xf32>
    %c1 = arith.constant 1 : index
    %c0_1 = arith.constant 0 : index
    %1 = vector.load %arg3[%c1, %c0_1] : memref<2x256xf32, #tpu.memory_space<vmem>>, vector<1x256xf32>
    %2 = tpu.iota {dimensions = array<i32: 0>} : vector<16x256xi32>
    %3 = arith.sitofp %2 : vector<16x256xi32> to vector<16x256xf32>
    %4 = tpu.iota {dimensions = array<i32: 0>} : vector<16x256xi32>
    %5 = arith.sitofp %4 : vector<16x256xi32> to vector<16x256xf32>
    %c1_i32 = arith.constant 1 : i32
    %6 = arith.muli %arg0, %c1_i32 : i32
    %c0_i32 = arith.constant 0 : i32
    %7 = arith.addi %6, %c0_i32 : i32
    %c6_i32 = arith.constant 6 : i32
    %8 = arith.muli %7, %c6_i32 : i32
    %c0_i32_2 = arith.constant 0 : i32
    %9 = arith.addi %8, %c0_i32_2 : i32
    %10 = arith.index_cast %9 : i32 to index
    %11 = memref.load %arg2[%10] : memref<12xf32, #tpu.memory_space<smem>>
    %c6_i32_3 = arith.constant 6 : i32
    %12 = arith.muli %7, %c6_i32_3 : i32
    %c1_i32_4 = arith.constant 1 : i32
    %13 = arith.addi %12, %c1_i32_4 : i32
    %14 = arith.index_cast %13 : i32 to index
    %15 = memref.load %arg2[%14] : memref<12xf32, #tpu.memory_space<smem>>
    %c6_i32_5 = arith.constant 6 : i32
    %16 = arith.muli %7, %c6_i32_5 : i32
    %c2_i32 = arith.constant 2 : i32
    %17 = arith.addi %16, %c2_i32 : i32
    %18 = arith.index_cast %17 : i32 to index
    %19 = memref.load %arg2[%18] : memref<12xf32, #tpu.memory_space<smem>>
    %c6_i32_6 = arith.constant 6 : i32
    %20 = arith.muli %7, %c6_i32_6 : i32
    %c3_i32 = arith.constant 3 : i32
    %21 = arith.addi %20, %c3_i32 : i32
    %22 = arith.index_cast %21 : i32 to index
    %23 = memref.load %arg2[%22] : memref<12xf32, #tpu.memory_space<smem>>
    %c6_i32_7 = arith.constant 6 : i32
    %24 = arith.muli %7, %c6_i32_7 : i32
    %c4_i32 = arith.constant 4 : i32
    %25 = arith.addi %24, %c4_i32 : i32
    %26 = arith.index_cast %25 : i32 to index
    %27 = memref.load %arg2[%26] : memref<12xf32, #tpu.memory_space<smem>>
    %c6_i32_8 = arith.constant 6 : i32
    %28 = arith.muli %7, %c6_i32_8 : i32
    %c5_i32 = arith.constant 5 : i32
    %29 = arith.addi %28, %c5_i32 : i32
    %30 = arith.index_cast %29 : i32 to index
    %31 = memref.load %arg2[%30] : memref<12xf32, #tpu.memory_space<smem>>
    %32 = vector.broadcast %11 : f32 to vector<1x256xf32>
    %33 = arith.mulf %32, %1 : vector<1x256xf32>
    %34 = vector.broadcast %15 : f32 to vector<1x256xf32>
    %35 = arith.mulf %34, %0 : vector<1x256xf32>
    %36 = arith.addf %33, %35 : vector<1x256xf32>
    %37 = vector.broadcast %19 : f32 to vector<1x256xf32>
    %38 = arith.addf %36, %37 : vector<1x256xf32>
    %39 = vector.broadcast %23 : f32 to vector<1x256xf32>
    %40 = arith.mulf %39, %1 : vector<1x256xf32>
    %41 = vector.broadcast %27 : f32 to vector<1x256xf32>
    %42 = arith.mulf %41, %0 : vector<1x256xf32>
    %43 = arith.addf %40, %42 : vector<1x256xf32>
    %44 = vector.broadcast %31 : f32 to vector<1x256xf32>
    %45 = arith.addf %43, %44 : vector<1x256xf32>
    %cst = arith.constant 1.000000e+00 : f32
    %46 = vector.broadcast %cst : f32 to vector<1x256xf32>
    %47 = arith.addf %38, %46 : vector<1x256xf32>
    %cst_9 = arith.constant 1.600000e+01 : f32
    %48 = vector.broadcast %cst_9 : f32 to vector<1x256xf32>
    %49 = arith.mulf %47, %48 : vector<1x256xf32>
    %cst_10 = arith.constant 1.000000e+00 : f32
    %50 = vector.broadcast %cst_10 : f32 to vector<1x256xf32>
    %51 = arith.subf %49, %50 : vector<1x256xf32>
    %cst_11 = arith.constant 5.000000e-01 : f32
    %52 = vector.broadcast %cst_11 : f32 to vector<1x256xf32>
    %53 = arith.mulf %51, %52 : vector<1x256xf32>
    %cst_12 = arith.constant 1.000000e+00 : f32
    %54 = vector.broadcast %cst_12 : f32 to vector<1x256xf32>
    %55 = arith.addf %45, %54 : vector<1x256xf32>
    %cst_13 = arith.constant 1.600000e+01 : f32
    %56 = vector.broadcast %cst_13 : f32 to vector<1x256xf32>
    %57 = arith.mulf %55, %56 : vector<1x256xf32>
    %cst_14 = arith.constant 1.000000e+00 : f32
    %58 = vector.broadcast %cst_14 : f32 to vector<1x256xf32>
    %59 = arith.subf %57, %58 : vector<1x256xf32>
    %cst_15 = arith.constant 5.000000e-01 : f32
    %60 = vector.broadcast %cst_15 : f32 to vector<1x256xf32>
    %61 = arith.mulf %59, %60 : vector<1x256xf32>
    %62 = math.floor %53 : vector<1x256xf32>
    %63 = math.floor %61 : vector<1x256xf32>
    %64 = arith.subf %53, %62 : vector<1x256xf32>
    %65 = arith.subf %61, %63 : vector<1x256xf32>
    %cst_16 = arith.constant 0.000000e+00 : f32
    %66 = vector.broadcast %cst_16 : f32 to vector<1x256xf32>
    %67 = arith.cmpf oge, %62, %66 : vector<1x256xf32>
    %cst_17 = arith.constant 1.500000e+01 : f32
    %68 = vector.broadcast %cst_17 : f32 to vector<1x256xf32>
    %69 = arith.cmpf ole, %62, %68 : vector<1x256xf32>
    %70 = arith.andi %67, %69 : vector<1x256xi1>
    %cst_18 = arith.constant -1.000000e+00 : f32
    %71 = vector.broadcast %cst_18 : f32 to vector<1x256xf32>
    %72 = arith.cmpf oge, %62, %71 : vector<1x256xf32>
    %cst_19 = arith.constant 1.400000e+01 : f32
    %73 = vector.broadcast %cst_19 : f32 to vector<1x256xf32>
    %74 = arith.cmpf ole, %62, %73 : vector<1x256xf32>
    %75 = arith.andi %72, %74 : vector<1x256xi1>
    %cst_20 = arith.constant 0.000000e+00 : f32
    %76 = vector.broadcast %cst_20 : f32 to vector<1x256xf32>
    %77 = arith.cmpf oge, %63, %76 : vector<1x256xf32>
    %cst_21 = arith.constant 1.500000e+01 : f32
    %78 = vector.broadcast %cst_21 : f32 to vector<1x256xf32>
    %79 = arith.cmpf ole, %63, %78 : vector<1x256xf32>
    %80 = arith.andi %77, %79 : vector<1x256xi1>
    %cst_22 = arith.constant -1.000000e+00 : f32
    %81 = vector.broadcast %cst_22 : f32 to vector<1x256xf32>
    %82 = arith.cmpf oge, %63, %81 : vector<1x256xf32>
    %cst_23 = arith.constant 1.400000e+01 : f32
    %83 = vector.broadcast %cst_23 : f32 to vector<1x256xf32>
    %84 = arith.cmpf ole, %63, %83 : vector<1x256xf32>
    %85 = arith.andi %82, %84 : vector<1x256xi1>
    %cst_24 = arith.constant 1.000000e+00 : f32
    %86 = vector.broadcast %cst_24 : f32 to vector<1x256xf32>
    %87 = arith.subf %86, %64 : vector<1x256xf32>
    %cst_25 = arith.constant 0.000000e+00 : f32
    %88 = vector.broadcast %cst_25 : f32 to vector<1x256xf32>
    %89 = arith.select %70, %87, %88 : vector<1x256xi1>, vector<1x256xf32>
    %cst_26 = arith.constant 0.000000e+00 : f32
    %90 = vector.broadcast %cst_26 : f32 to vector<1x256xf32>
    %91 = arith.select %75, %64, %90 : vector<1x256xi1>, vector<1x256xf32>
    %cst_27 = arith.constant 1.000000e+00 : f32
    %92 = vector.broadcast %cst_27 : f32 to vector<1x256xf32>
    %93 = arith.subf %92, %65 : vector<1x256xf32>
    %cst_28 = arith.constant 0.000000e+00 : f32
    %94 = vector.broadcast %cst_28 : f32 to vector<1x256xf32>
    %95 = arith.select %80, %93, %94 : vector<1x256xi1>, vector<1x256xf32>
    %cst_29 = arith.constant 0.000000e+00 : f32
    %96 = vector.broadcast %cst_29 : f32 to vector<1x256xf32>
    %97 = arith.select %85, %65, %96 : vector<1x256xi1>, vector<1x256xf32>
    %98 = vector.broadcast %62 : vector<1x256xf32> to vector<16x256xf32>
    %99 = arith.cmpf oeq, %3, %98 : vector<16x256xf32>
    %cst_30 = arith.constant 0.000000e+00 : f32
    %100 = vector.shape_cast %89 : vector<1x256xf32> to vector<1x256xf32>
    %101 = vector.broadcast %100 : vector<1x256xf32> to vector<16x256xf32>
    %102 = vector.broadcast %cst_30 : f32 to vector<16x256xf32>
    %103 = arith.select %99, %101, %102 : vector<16x256xi1>, vector<16x256xf32>
    %cst_31 = arith.constant 1.000000e+00 : f32
    %104 = vector.broadcast %cst_31 : f32 to vector<1x256xf32>
    %105 = arith.addf %62, %104 : vector<1x256xf32>
    %106 = vector.broadcast %105 : vector<1x256xf32> to vector<16x256xf32>
    %107 = arith.cmpf oeq, %3, %106 : vector<16x256xf32>
    %cst_32 = arith.constant 0.000000e+00 : f32
    %108 = vector.shape_cast %91 : vector<1x256xf32> to vector<1x256xf32>
    %109 = vector.broadcast %108 : vector<1x256xf32> to vector<16x256xf32>
    %110 = vector.broadcast %cst_32 : f32 to vector<16x256xf32>
    %111 = arith.select %107, %109, %110 : vector<16x256xi1>, vector<16x256xf32>
    %112 = arith.addf %103, %111 : vector<16x256xf32>
    %113 = vector.broadcast %63 : vector<1x256xf32> to vector<16x256xf32>
    %114 = arith.cmpf oeq, %5, %113 : vector<16x256xf32>
    %cst_33 = arith.constant 0.000000e+00 : f32
    %115 = vector.shape_cast %95 : vector<1x256xf32> to vector<1x256xf32>
    %116 = vector.broadcast %115 : vector<1x256xf32> to vector<16x256xf32>
    %117 = vector.broadcast %cst_33 : f32 to vector<16x256xf32>
    %118 = arith.select %114, %116, %117 : vector<16x256xi1>, vector<16x256xf32>
    %cst_34 = arith.constant 1.000000e+00 : f32
    %119 = vector.broadcast %cst_34 : f32 to vector<1x256xf32>
    %120 = arith.addf %63, %119 : vector<1x256xf32>
    %121 = vector.broadcast %120 : vector<1x256xf32> to vector<16x256xf32>
    %122 = arith.cmpf oeq, %5, %121 : vector<16x256xf32>
    %cst_35 = arith.constant 0.000000e+00 : f32
    %123 = vector.shape_cast %97 : vector<1x256xf32> to vector<1x256xf32>
    %124 = vector.broadcast %123 : vector<1x256xf32> to vector<16x256xf32>
    %125 = vector.broadcast %cst_35 : f32 to vector<16x256xf32>
    %126 = arith.select %122, %124, %125 : vector<16x256xi1>, vector<16x256xf32>
    %127 = arith.addf %118, %126 : vector<16x256xf32>
    %c0_36 = arith.constant 0 : index
    %c0_37 = arith.constant 0 : index
    %c0_38 = arith.constant 0 : index
    %128 = vector.load %arg4[%c0_36, %c0_37, %c0_38] : memref<1x64x16xf32, #tpu.memory_space<vmem>>, vector<1x64x16xf32>
    %129 = vector.shape_cast %128 : vector<1x64x16xf32> to vector<64x16xf32>
    %cst_39 = arith.constant dense<0.000000e+00> : vector<64x256xf32>
    %130 = tpu.matmul %129, %112, %cst_39 {dimension_numbers = #tpu.dot_dimension_numbers<[1], [0], [0], [1], [0, 0, 1, 1], [], []>} : vector<64x16xf32>, vector<16x256xf32>, vector<64x256xf32> -> vector<64x256xf32>
    %131 = vector.shape_cast %130 : vector<64x256xf32> to vector<4x16x256xf32>
    %132 = vector.shape_cast %127 : vector<16x256xf32> to vector<1x16x256xf32>
    %133 = vector.broadcast %132 : vector<1x16x256xf32> to vector<4x16x256xf32>
    %134 = arith.mulf %131, %133 : vector<4x16x256xf32>
    %cst_40 = arith.constant dense<0.000000e+00> : vector<4x256xf32>
    %135 = vector.multi_reduction <add>, %134, %cst_40 [1] : vector<4x16x256xf32> to vector<4x256xf32>
    %c0_41 = arith.constant 0 : index
    %c0_42 = arith.constant 0 : index
    %c0_43 = arith.constant 0 : index
    %136 = vector.load %arg5[%c0_41, %c0_42, %c0_43] : memref<1x4x256xf32, #tpu.memory_space<vmem>>, vector<1x4x256xf32>
    %137 = vector.shape_cast %136 : vector<1x4x256xf32> to vector<4x256xf32>
    %138 = vector.shape_cast %135 : vector<4x256xf32> to vector<1x4x256xf32>
    tpu.vector_store %arg5[%c0_41, %c0_42, %c0_43], %138 {strides = array<i32>} : memref<1x4x256xf32, #tpu.memory_space<vmem>>, vector<1x4x256xf32>,
    return
  }
  func.func @transform_0(%arg0: i32, %arg1: i32) -> i32 {
    %c0_i32 = arith.constant 0 : i32
    %c0_i32_0 = arith.constant 0 : i32
    return %c0_i32 : i32
  }
  func.func @transform_1(%arg0: i32, %arg1: i32) -> (i32, i32) {
    %c0_i32 = arith.constant 0 : i32
    %c0_i32_0 = arith.constant 0 : i32
    return %c0_i32, %arg1 : i32, i32
  }
  func.func @transform_2(%arg0: i32, %arg1: i32) -> (i32, i32, i32) {
    %c0_i32 = arith.constant 0 : i32
    %c0_i32_0 = arith.constant 0 : i32
    %c0_i32_1 = arith.constant 0 : i32
    return %arg0, %c0_i32, %c0_i32_0 : i32, i32, i32
  }
  func.func @transform_3(%arg0: i32, %arg1: i32) -> (i32, i32, i32) {
    %c0_i32 = arith.constant 0 : i32
    %c0_i32_0 = arith.constant 0 : i32
    return %arg0, %c0_i32, %arg1 : i32, i32, i32
  }
}

</mosaic_0001>

<llo_original>
// kernel: tpu_custom_call.1
$region0: #{tpu_custom_call.1}
  #allocation0 [shape = 'u32[]', space=smem, size = 0x4, offset = 0x4, fixed_abs, tag = 'smem constant byte address 0x4 - core index']
  #allocation1 [shape = 'u32[144,128]{1,0:T(1,128)}', space=vmem, size = 0x12000, scoped, tag = 'internal scratch']
  %s0 = inlined_call_operand.vmem [shape: f32[12], index: 0, kind: input, shape index: {}]
  %s1 = inlined_call_operand.vmem [shape: f32[2,256], index: 1, kind: input, shape index: {}]
  %s2 = inlined_call_operand.vmem [shape: f32[2,64,16], index: 2, kind: input, shape index: {}]
  %s3 = inlined_call_operand.hbm [shape: f32[2,4,256], index: 3, kind: output, shape index: {}]
  %s4 = sld [smem:[#allocation0]]
  $region49: #{tpu_custom_call.1} parent=0
    _
  %s6 = ssub.s32 1, %s4
  %s7 = scalar_select 0, %s6, %s4
  $region1: #{tpu_custom_call.1} parent=0
    #allocation2 [shape = 'u8[512]{0}', space=smem, size = 0x200, scoped, tag = 'input window, operand 0, single buffered']
    #allocation3 [shape = 's32[2]{0}', space=sflag, size = 0x8, scoped, tag = 'scoped memory for tpu_custom_call.1']
    #allocation4 [shape = 's32[2]{0}', space=sflag, size = 0x8, scoped, tag = 'scoped memory for tpu_custom_call.1']
    #allocation5 [shape = 'u8[8192]{0}', space=vmem, size = 0x2000, scoped, tag = 'output window, operand 0']
    %8 = vsyncpa [#allocation4], 0
    %9 = vsyncpa [#allocation3], 0
    %s10 = scalar_lea.sflag [#allocation3], 1
    %11 = vsyncpa %s10, 0
    loop: start=0, step=1, limit=4
    $region2: #{tpu_custom_call.1} parent=1 // loop_pre_header
      _
    $region3: #{tpu_custom_call.1} parent=1 // loop_header
      %s13 = sphi 0, %s17
      %p14 = scmp.ge.s32.totalorder %s13, 4
      %s20 = sphi 0, %s32
      %s21 = sphi 0, %s28
      %s22 = sphi 0, %s20
      %s23 = sphi 0, %s21
      %s24 = sphi 0, %s22
      %s25 = sphi 0, %s23
      %s33 = sphi 0, %s33
      %s35 = sphi 0, %s33
      %s36 = sphi 0, %s35
      %s50 = sphi 0, %s36
      %s56 = sphi 0, %s58
      %s59 = sphi 0, %s56
      %s60 = sphi 0, %s59
      %s76 = sphi 0, %s60
      %s82 = sphi 0, %s84
      %s85 = sphi 0, %s82
      %s86 = sphi 0, %s85
      %s102 = sphi 0, %s86
      %s110 = sphi 0, %s112
      %s113 = sphi 0, %s110
      %s114 = sphi 0, %s113
      %s130 = sphi 0, %s114
    $region4: #{tpu_custom_call.1} parent=1 // loop_header_branch
      %16 = sbr.rel (%p14) target = $region8
    $region5: #{tpu_custom_call.1} parent=1 // loop_body
      %s18 = ssub.s32 %s13, 1
      %s19 = ssub.s32 %s13, 2
      %s26 = sadd.s32 1, %s21
      %p27 = scmp.ge.s32.totalorder %s26, 1
      %s28 = scalar_select %p27, 0, %s26
      %s29 = sadd.s32 1, %s20
      %s30 = scalar_select %p27, %s29, %s20
      %p31 = scmp.ge.s32.totalorder %s30, 2
      %s32 = scalar_select %p31, 0, %s30
      %s34 = sadd.s32 %s33, 1
      %p37 = scmp.eq.s32.totalorder %s13, 1
      %p38 = scmp.ne.s32.totalorder %s33, %s35
      %p39 = scmp.eq.s32.totalorder %s13, 0
      %p40 = por %p38, %p39
      %p41 = scmp.ne.s32.totalorder %s33, %s35
      %p42 = scmp.eq.s32.totalorder %s18, 1
      %p43 = por %p41, %p42
      %p44 = scmp.ne.s32.totalorder %s35, %s36
      %p45 = scmp.eq.s32.totalorder %s18, 0
      %p46 = por %p44, %p45
      %p47 = scmp.ne.s32.totalorder %s35, %s36
      %p48 = scmp.eq.s32.totalorder %s19, 1
      %p49 = por %p47, %p48
      %p51 = scmp.ne.s32.totalorder %s36, %s50
      %p52 = scmp.eq.s32.totalorder %s19, 0
      %p53 = por %p51, %p52
      %s54 = ssub.s32 %s21, %s28
      %p55 = scmp.eq.s32.totalorder %s54, 0
      %s57 = sadd.s32 %s56, 1
      %s58 = scalar_select %p55, %s56, %s57
      %p61 = pneg %p55
      %p62 = scmp.eq.s32.totalorder %s13, 1
      %p63 = por %p61, %p62
      %p64 = scmp.ne.s32.totalorder %s56, %s59
      %p65 = scmp.eq.s32.totalorder %s13, 0
      %p66 = por %p64, %p65
      %p67 = scmp.ne.s32.totalorder %s56, %s59
      %p68 = scmp.eq.s32.totalorder %s18, 1
      %p69 = por %p67, %p68
      %p70 = scmp.ne.s32.totalorder %s59, %s60
      %p71 = scmp.eq.s32.totalorder %s18, 0
      %p72 = por %p70, %p71
      %p73 = scmp.ne.s32.totalorder %s59, %s60
      %p74 = scmp.eq.s32.totalorder %s19, 1
      %p75 = por %p73, %p74
      %p77 = scmp.ne.s32.totalorder %s60, %s76
      %p78 = scmp.eq.s32.totalorder %s19, 0
      %p79 = por %p77, %p78
      %s80 = ssub.s32 %s20, %s32
      %p81 = scmp.eq.s32.totalorder %s80, 0
      %s83 = sadd.s32 %s82, 1
      %s84 = scalar_select %p81, %s82, %s83
      %p87 = pneg %p81
      %p88 = scmp.eq.s32.totalorder %s13, 1
      %p89 = por %p87, %p88
      %p90 = scmp.ne.s32.totalorder %s82, %s85
      %p91 = scmp.eq.s32.totalorder %s13, 0
      %p92 = por %p90, %p91
      %p93 = scmp.ne.s32.totalorder %s82, %s85
      %p94 = scmp.eq.s32.totalorder %s18, 1
      %p95 = por %p93, %p94
      %p96 = scmp.ne.s32.totalorder %s85, %s86
      %p97 = scmp.eq.s32.totalorder %s18, 0
      %p98 = por %p96, %p97
      %p99 = scmp.ne.s32.totalorder %s85, %s86
      %p100 = scmp.eq.s32.totalorder %s19, 1
      %p101 = por %p99, %p100
      %p103 = scmp.ne.s32.totalorder %s86, %s102
      %p104 = scmp.eq.s32.totalorder %s19, 0
      %p105 = por %p103, %p104
      %s106 = ssub.s32 %s20, %s32
      %s107 = ssub.s32 %s21, %s28
      %s108 = sor.u32 %s106, %s107
      %p109 = scmp.eq.s32.totalorder %s108, 0
      %s111 = sadd.s32 %s110, 1
      %s112 = scalar_select %p109, %s110, %s111
      %p115 = pneg %p109
      %p116 = scmp.eq.s32.totalorder %s13, 1
      %p117 = por %p115, %p116
      %p118 = scmp.ne.s32.totalorder %s110, %s113
      %p119 = scmp.eq.s32.totalorder %s13, 0
      %p120 = por %p118, %p119
      %p121 = scmp.ne.s32.totalorder %s110, %s113
      %p122 = scmp.eq.s32.totalorder %s18, 1
      %p123 = por %p121, %p122
      %p124 = scmp.ne.s32.totalorder %s113, %s114
      %p125 = scmp.eq.s32.totalorder %s18, 0
      %p126 = por %p124, %p125
      %p127 = scmp.ne.s32.totalorder %s113, %s114
      %p128 = scmp.eq.s32.totalorder %s19, 1
      %p129 = por %p127, %p128
      %p131 = scmp.ne.s32.totalorder %s114, %s130
      %p132 = scmp.eq.s32.totalorder %s19, 0
      %p133 = por %p131, %p132
      %p134 = scmp.le.s32.totalorder 1, %s13
      %p135 = scmp.lt.s32.totalorder %s13, 3
      %p136 = pnand %p134, %p135
      %p137 = pneg %p136
      // Predicated region
      $region9: #{tpu_custom_call.1} parent=5 // pred_check
        _
      $region10: #{tpu_custom_call.1} parent=5 // pred_check_branch
        %139 = sbr.rel (%p136) target = $region12
      $region11: #{tpu_custom_call.1} parent=5 // pred_region
        %s140 = ssub.s32 %s13, 1
        // Predicated region
        $region13: #{tpu_custom_call.1} parent=11 // pred_check
          %p141 = pneg %p46
        $region14: #{tpu_custom_call.1} parent=11 // pred_check_branch
          %143 = sbr.rel (%p141) target = $region16
        $region15: #{tpu_custom_call.1} parent=11 // pred_region
          %s145 = ssub.s32 16, 16
          %146 = vsyncadd [#allocation4], %s145
          %s148 = sshll.u32 %s0, 4
          %s149 = int_to_ptr.vmem [resolvable:$true] %s148
          %151 = dma.vmem_to_smem %s149, 16, [#allocation2], [#allocation4]
        $region16: #{tpu_custom_call.1} parent=11 // pred_fallthru
          _
        // Predicated region
        $region17: #{tpu_custom_call.1} parent=11 // pred_check
          %p152 = pneg %p72
        $region18: #{tpu_custom_call.1} parent=11 // pred_check_branch
          %154 = sbr.rel (%p152) target = $region20
        $region19: #{tpu_custom_call.1} parent=11 // pred_region
          %s155 = smul.u32 2, %s23
          %p156 = scmp.lt.s32.totalorder %s155, 1
          %s157 = scalar_select %p156, %s155, 1
          %s158 = smul.addr %s157, 2
          %s159 = scalar_lea.vmem %s1, %s158
          %s160 = smul.u32 2, %s23
        $region20: #{tpu_custom_call.1} parent=11 // pred_fallthru
          _
      $region12: #{tpu_custom_call.1} parent=5 // pred_fallthru
        _
      %p161 = scmp.lt.s32.totalorder %s13, 2
      // Predicated region
      $region21: #{tpu_custom_call.1} parent=5 // pred_check
        %p162 = pneg %p161
      $region22: #{tpu_custom_call.1} parent=5 // pred_check_branch
        %164 = sbr.rel (%p162) target = $region24
      $region23: #{tpu_custom_call.1} parent=5 // pred_region
        // Predicated region
        $region25: #{tpu_custom_call.1} parent=23 // pred_check
          %p165 = pneg %p92
        $region26: #{tpu_custom_call.1} parent=23 // pred_check_branch
          %167 = sbr.rel (%p165) target = $region28
        $region27: #{tpu_custom_call.1} parent=23 // pred_region
          %p168 = scmp.lt.s32.totalorder %s20, 1
          %s169 = scalar_select %p168, %s20, 1
          %s170 = smul.addr %s169, 8
          %s171 = smul.addr %s170, 8
          %s172 = scalar_lea.vmem %s2, %s171
        $region28: #{tpu_custom_call.1} parent=23 // pred_fallthru
          _
      $region24: #{tpu_custom_call.1} parent=5 // pred_fallthru
        _
      %p173 = scmp.le.s32.totalorder 1, %s13
      %p174 = scmp.lt.s32.totalorder %s13, 3
      %p175 = pnand %p173, %p174
      %p176 = pneg %p175
      // Predicated region
      $region29: #{tpu_custom_call.1} parent=5 // pred_check
        _
      $region30: #{tpu_custom_call.1} parent=5 // pred_check_branch
        %178 = sbr.rel (%p175) target = $region32
      $region31: #{tpu_custom_call.1} parent=5 // pred_region
        %s179 = ssub.s32 %s13, 1
        // Predicated region
        $region33: #{tpu_custom_call.1} parent=31 // pred_check
          %p180 = pneg %p46
        $region34: #{tpu_custom_call.1} parent=31 // pred_check_branch
          %182 = sbr.rel (%p180) target = $region36
        $region35: #{tpu_custom_call.1} parent=31 // pred_region
          %183 = dma.done [#allocation4], 16
        $region36: #{tpu_custom_call.1} parent=31 // pred_fallthru
          _
        %184 = sfence
        %p185 = pneg %p46
        %p186 = pneg %p43
        %s187 = smul.u32 2, %s23
        %p188 = scmp.lt.s32.totalorder %s187, 1
        %s189 = scalar_select %p188, %s187, 1
        %s190 = smul.addr %s189, 2
        %s191 = scalar_lea.vmem %s1, %s190
        %p192 = pneg %p72
        %p193 = pneg %p69
        %p194 = scmp.lt.s32.totalorder %s22, 1
        %s195 = scalar_select %p194, %s22, 1
        %s196 = smul.addr %s195, 8
        %s197 = smul.addr %s196, 8
        %s198 = scalar_lea.vmem %s2, %s197
        %p199 = pneg %p98
        %p200 = pneg %p95
        %p201 = pneg %p126
        %p202 = pneg %p123
        %s203 = sand.u32 %s113, 1
        %s204 = scalar_lea.sflag [#allocation3], %s203
        %s205 = sand.u32 %s113, 1
        %s206 = smul.addr %s205, 8
        %s207 = scalar_lea.vmem [#allocation5], %s206
        %s208 = smul.u32 2, %s23
        %p209 = scmp.lt.s32.totalorder %s208, 1
        %s210 = scalar_select %p209, %s208, 1
        %s211 = smul.addr %s210, 2
        %s212 = scalar_lea.vmem %s1, %s211
        %s213 = smul.u32 2, %s23
        %p214 = scmp.lt.s32.totalorder %s22, 1
        %s215 = scalar_select %p214, %s22, 1
        %s216 = smul.addr %s215, 8
        %s217 = smul.addr %s216, 8
        %s218 = scalar_lea.vmem %s2, %s217
        %s219 = smul.u32 2, %s23
        %v220 = vld [vmem:[%s212] ss:$2 sm:$0x3]
        %s221 = scalar_lea.vmem %s212, 1
        %v222 = vld [vmem:[%s221] ss:$2 sm:$0x3]
        %v223 = vlaneseq
        %v224 = vshrl.u32 %v223, 7
        %v225 = vadd.s32 %v224, 8
        %v226 = vcvt.s32.f32 %v224
        %v227 = vcvt.s32.f32 %v225
        %s228 = smul.u32 %s22, 6
        %s229 = sld [smem:[#allocation2 + %s228]]
        %s230 = sadd.s32 %s228, 1
        %s231 = sld [smem:[#allocation2 + %s230]]
        %s232 = sadd.s32 %s228, 2
        %s233 = sld [smem:[#allocation2 + %s232]]
        %s234 = sadd.s32 %s228, 3
        %s235 = sld [smem:[#allocation2 + %s234]]
        %s236 = sadd.s32 %s228, 4
        %s237 = sld [smem:[#allocation2 + %s236]]
        %s238 = sadd.s32 %s228, 5
        %s239 = sld [smem:[#allocation2 + %s238]]
        %v240 = vstv %s229
        %v241 = vmul.f32 %v240, %v222
        %v242 = vstv %s231
        %v243 = vmul.f32 %v242, %v220
        %v244 = vadd.f32 %v241, %v243
        %v245 = vstv %s233
        %v246 = vadd.f32 %v244, %v245
        %v247 = vstv %s235
        %v248 = vmul.f32 %v247, %v222
        %v249 = vstv %s237
        %v250 = vmul.f32 %v249, %v220
        %v251 = vadd.f32 %v248, %v250
        %v252 = vstv %s239
        %v253 = vadd.f32 %v251, %v252
        %v254 = vadd.f32 %v246, 1.0
        %v255 = vmul.f32 %v254, 16.0
        %v256 = vsub.f32 %v255, 1.0
        %v257 = vmul.f32 %v256, 0.5
        %v258 = vadd.f32 %v253, 1.0
        %v259 = vmul.f32 %v258, 16.0
        %v260 = vsub.f32 %v259, 1.0
        %v261 = vmul.f32 %v260, 0.5
        %v262 = vfloor.f32 %v257
        %v263 = vfloor.f32 %v261
        %v264 = vsub.f32 %v257, %v262
        %v265 = vsub.f32 %v261, %v263
        %vm266 = vcmp.ge.f32.partialorder %v262, 0.0
        %vm267 = vcmp.le.f32.partialorder %v262, 15.0
        %vm268 = vmand %vm266, %vm267
        %vm269 = vcmp.ge.f32.partialorder %v262, -1.0
        %vm270 = vcmp.le.f32.partialorder %v262, 14.0
        %vm271 = vmand %vm269, %vm270
        %vm272 = vcmp.ge.f32.partialorder %v263, 0.0
        %vm273 = vcmp.le.f32.partialorder %v263, 15.0
        %vm274 = vmand %vm272, %vm273
        %vm275 = vcmp.ge.f32.partialorder %v263, -1.0
        %vm276 = vcmp.le.f32.partialorder %v263, 14.0
        %vm277 = vmand %vm275, %vm276
        %v278 = vsub.f32 1.0, %v264
        %v279 = vsel %vm268, %v278, 0.0
        %v280 = vsel %vm271, %v264, 0.0
        %v281 = vsub.f32 1.0, %v265
        %v282 = vsel %vm274, %v281, 0.0
        %v283 = vsel %vm277, %v265, 0.0
        %v285 = vlaneseq
        %v286 = vshrl.u32 %v285, 7
        %v287 = vsub.s32 0, %v286
        %v288 = vrot.slane %v262, %v287
        %v289 = vlaneseq
        %v290 = vshrl.u32 %v289, 7
        %v291 = vsub.s32 1, %v290
        %v292 = vrot.slane %v262, %v291
        %vm295 = vcmp.eq.f32.partialorder %v226, %v288
        %vm296 = vcmp.eq.f32.partialorder %v226, %v292
        %vm297 = vcmp.eq.f32.partialorder %v227, %v288
        %vm298 = vcmp.eq.f32.partialorder %v227, %v292
        %v300 = vlaneseq
        %v301 = vshrl.u32 %v300, 7
        %v302 = vsub.s32 0, %v301
        %v303 = vrot.slane %v279, %v302
        %v304 = vlaneseq
        %v305 = vshrl.u32 %v304, 7
        %v306 = vsub.s32 1, %v305
        %v307 = vrot.slane %v279, %v306
        %v310 = vsel %vm295, %v303, 0.0
        %v311 = vsel %vm296, %v307, 0.0
        %v312 = vsel %vm297, %v303, 0.0
        %v313 = vsel %vm298, %v307, 0.0
        %v314 = vadd.f32 %v262, 1.0
        %v316 = vlaneseq
        %v317 = vshrl.u32 %v316, 7
        %v318 = vsub.s32 0, %v317
        %v319 = vrot.slane %v314, %v318
        %v320 = vlaneseq
        %v321 = vshrl.u32 %v320, 7
        %v322 = vsub.s32 1, %v321
        %v323 = vrot.slane %v314, %v322
        %vm326 = vcmp.eq.f32.partialorder %v226, %v319
        %vm327 = vcmp.eq.f32.partialorder %v226, %v323
        %vm328 = vcmp.eq.f32.partialorder %v227, %v319
        %vm329 = vcmp.eq.f32.partialorder %v227, %v323
        %v331 = vlaneseq
        %v332 = vshrl.u32 %v331, 7
        %v333 = vsub.s32 0, %v332
        %v334 = vrot.slane %v280, %v333
        %v335 = vlaneseq
        %v336 = vshrl.u32 %v335, 7
        %v337 = vsub.s32 1, %v336
        %v338 = vrot.slane %v280, %v337
        %v341 = vsel %vm326, %v334, 0.0
        %v342 = vsel %vm327, %v338, 0.0
        %v343 = vsel %vm328, %v334, 0.0
        %v344 = vsel %vm329, %v338, 0.0
        %v345 = vadd.f32 %v310, %v341
        %v346 = vadd.f32 %v311, %v342
        %v347 = vadd.f32 %v312, %v343
        %v348 = vadd.f32 %v313, %v344
        %v350 = vlaneseq
        %v351 = vshrl.u32 %v350, 7
        %v352 = vsub.s32 0, %v351
        %v353 = vrot.slane %v263, %v352
        %v354 = vlaneseq
        %v355 = vshrl.u32 %v354, 7
        %v356 = vsub.s32 1, %v355
        %v357 = vrot.slane %v263, %v356
        %vm360 = vcmp.eq.f32.partialorder %v226, %v353
        %vm361 = vcmp.eq.f32.partialorder %v226, %v357
        %vm362 = vcmp.eq.f32.partialorder %v227, %v353
        %vm363 = vcmp.eq.f32.partialorder %v227, %v357
        %v365 = vlaneseq
        %v366 = vshrl.u32 %v365, 7
        %v367 = vsub.s32 0, %v366
        %v368 = vrot.slane %v282, %v367
        %v369 = vlaneseq
        %v370 = vshrl.u32 %v369, 7
        %v371 = vsub.s32 1, %v370
        %v372 = vrot.slane %v282, %v371
        %v375 = vsel %vm360, %v368, 0.0
        %v376 = vsel %vm361, %v372, 0.0
        %v377 = vsel %vm362, %v368, 0.0
        %v378 = vsel %vm363, %v372, 0.0
        %v379 = vadd.f32 %v263, 1.0
        %v381 = vlaneseq
        %v382 = vshrl.u32 %v381, 7
        %v383 = vsub.s32 0, %v382
        %v384 = vrot.slane %v379, %v383
        %v385 = vlaneseq
        %v386 = vshrl.u32 %v385, 7
        %v387 = vsub.s32 1, %v386
        %v388 = vrot.slane %v379, %v387
        %vm391 = vcmp.eq.f32.partialorder %v226, %v384
        %vm392 = vcmp.eq.f32.partialorder %v226, %v388
        %vm393 = vcmp.eq.f32.partialorder %v227, %v384
        %vm394 = vcmp.eq.f32.partialorder %v227, %v388
        %v396 = vlaneseq
        %v397 = vshrl.u32 %v396, 7
        %v398 = vsub.s32 0, %v397
        %v399 = vrot.slane %v283, %v398
        %v400 = vlaneseq
        %v401 = vshrl.u32 %v400, 7
        %v402 = vsub.s32 1, %v401
        %v403 = vrot.slane %v283, %v402
        %v406 = vsel %vm391, %v399, 0.0
        %v407 = vsel %vm392, %v403, 0.0
        %v408 = vsel %vm393, %v399, 0.0
        %v409 = vsel %vm394, %v403, 0.0
        %v410 = vadd.f32 %v375, %v406
        %v411 = vadd.f32 %v376, %v407
        %v412 = vadd.f32 %v377, %v408
        %v413 = vadd.f32 %v378, %v409
        %v414 = vld [vmem:[%s218] sm:$0xff]
        %v415 = vld [vmem:[%s218 + $0x8] sm:$0xff]
        %v416 = vld [vmem:[%s218 + $0x10] sm:$0xff]
        %v417 = vld [vmem:[%s218 + $0x18] sm:$0xff]
        %v418 = vld [vmem:[%s218 + $0x20] sm:$0xff]
        %v419 = vld [vmem:[%s218 + $0x28] sm:$0xff]
        %v420 = vld [vmem:[%s218 + $0x30] sm:$0xff]
        %v421 = vld [vmem:[%s218 + $0x38] sm:$0xff]
        %vm422 = vcmask 130048
        %v424 = vsel %vm422, %v414, 0
        %v427 = vsel %vm422, %v415, 0
        %v430 = vsel %vm422, %v416, 0
        %v433 = vsel %vm422, %v417, 0
        %v436 = vsel %vm422, %v418, 0
        %v439 = vsel %vm422, %v419, 0
        %v442 = vsel %vm422, %v420, 0
        %v445 = vsel %vm422, %v421, 0
        %447 = vmatprep.subr.mxu0 %v346
        %448 = vmatpush1.msra.mxu0 %v345
        %449 = vmatprep.subr.mxu0 %v348
        %450 = vmatpush1.msra.mxu0 %v347
        %451 = vmatprep.subr.mxu0 0.0
        %452 = vmatpush1.msra.mxu0 0.0
        %453 = vmatprep.subr.mxu0 0.0
        %454 = vmatpush1.msra.mxu0 0.0
        %455 = vmatprep.subr.mxu0 0.0
        %456 = vmatpush1.msra.mxu0 0.0
        %457 = vmatprep.subr.mxu0 0.0
        %458 = vmatpush1.msra.mxu0 0.0
        %459 = vmatprep.subr.mxu0 0.0
        %460 = vmatpush1.msra.mxu0 0.0
        %461 = vmatprep.subr.mxu0 0.0
        %462 = vmatpush1.msra.mxu0 0.0
        %463 = vmatprep.subr.mxu0 0.0
        %464 = vmatpush1.msra.mxu0 0.0
        %465 = vmatprep.subr.mxu0 0.0
        %466 = vmatpush1.msra.mxu0 0.0
        %467 = vmatprep.subr.mxu0 0.0
        %468 = vmatpush1.msra.mxu0 0.0
        %469 = vmatprep.subr.mxu0 0.0
        %470 = vmatpush1.msra.mxu0 0.0
        %471 = vmatprep.subr.mxu0 0.0
        %472 = vmatpush1.msra.mxu0 0.0
        %473 = vmatprep.subr.mxu0 0.0
        %474 = vmatpush1.msra.mxu0 0.0
        %475 = vmatprep.subr.mxu0 0.0
        %476 = vmatpush1.msra.mxu0 0.0
        %477 = vmatprep.subr.mxu0 0.0
        %478 = vmatpush1.msra.mxu0 0.0
        %479 = vmatprep.subr.mxu0 0.0
        %480 = vmatpush1.msra.mxu0 0.0
        %481 = vmatprep.subr.mxu0 0.0
        %482 = vmatpush1.msra.mxu0 0.0
        %483 = vmatprep.subr.mxu0 0.0
        %484 = vmatpush1.msra.mxu0 0.0
        %485 = vmatprep.subr.mxu0 0.0
        %486 = vmatpush1.msra.mxu0 0.0
        %487 = vmatprep.subr.mxu0 0.0
        %488 = vmatpush1.msra.mxu0 0.0
        %489 = vmatprep.subr.mxu0 0.0
        %490 = vmatpush1.msra.mxu0 0.0
        %491 = vmatprep.subr.mxu0 0.0
        %492 = vmatpush1.msra.mxu0 0.0
        %493 = vmatprep.subr.mxu0 0.0
        %494 = vmatpush1.msra.mxu0 0.0
        %495 = vmatprep.subr.mxu0 0.0
        %496 = vmatpush1.msra.mxu0 0.0
        %497 = vmatprep.subr.mxu0 0.0
        %498 = vmatpush1.msra.mxu0 0.0
        %499 = vmatprep.subr.mxu0 0.0
        %500 = vmatpush1.msra.mxu0 0.0
        %501 = vmatprep.subr.mxu0 0.0
        %502 = vmatpush1.msra.mxu0 0.0
        %503 = vmatprep.subr.mxu0 0.0
        %504 = vmatpush1.msra.mxu0 0.0
        %505 = vmatprep.subr.mxu0 0.0
        %506 = vmatpush1.msra.mxu0 0.0
        %507 = vmatprep.subr.mxu0 0.0
        %508 = vmatpush1.msra.mxu0 0.0
        %509 = vmatprep.subr.mxu0 0.0
        %510 = vmatpush1.msra.mxu0 0.0
        %511 = vmatprep.mubr.f32.mxu0 0.0
        %512 = vmatmul.mubr.f32.gmra.mrb[0].mxu0 %v424
        %v513 = vpop.f32.mrb[0].mxu0
        %v514 = vadd.f32 0.0, %v513
        %v515 = vpop.f32.mrb[0].mxu0
        %v516 = vadd.f32 0.0, %v515
        %517 = vmatprep.mubr.f32.mxu0 0.0
        %518 = vmatmul.mubr.f32.gmra.mrb[0].mxu0 %v427
        %v519 = vpop.f32.mrb[0].mxu0
        %v520 = vadd.f32 0.0, %v519
        %v521 = vpop.f32.mrb[0].mxu0
        %v522 = vadd.f32 0.0, %v521
        %523 = vmatprep.mubr.f32.mxu0 0.0
        %524 = vmatmul.mubr.f32.gmra.mrb[0].mxu0 %v430
        %v525 = vpop.f32.mrb[0].mxu0
        %v526 = vadd.f32 0.0, %v525
        %v527 = vpop.f32.mrb[0].mxu0
        %v528 = vadd.f32 0.0, %v527
        %529 = vmatprep.mubr.f32.mxu0 0.0
        %530 = vmatmul.mubr.f32.gmra.mrb[0].mxu0 %v433
        %v531 = vpop.f32.mrb[0].mxu0
        %v532 = vadd.f32 0.0, %v531
        %v533 = vpop.f32.mrb[0].mxu0
        %v534 = vadd.f32 0.0, %v533
        %535 = vmatprep.mubr.f32.mxu0 0.0
        %536 = vmatmul.mubr.f32.gmra.mrb[0].mxu0 %v436
        %v537 = vpop.f32.mrb[0].mxu0
        %v538 = vadd.f32 0.0, %v537
        %v539 = vpop.f32.mrb[0].mxu0
        %v540 = vadd.f32 0.0, %v539
        %541 = vmatprep.mubr.f32.mxu0 0.0
        %542 = vmatmul.mubr.f32.gmra.mrb[0].mxu0 %v439
        %v543 = vpop.f32.mrb[0].mxu0
        %v544 = vadd.f32 0.0, %v543
        %v545 = vpop.f32.mrb[0].mxu0
        %v546 = vadd.f32 0.0, %v545
        %547 = vmatprep.mubr.f32.mxu0 0.0
        %548 = vmatmul.mubr.f32.gmra.mrb[0].mxu0 %v442
        %v549 = vpop.f32.mrb[0].mxu0
        %v550 = vadd.f32 0.0, %v549
        %v551 = vpop.f32.mrb[0].mxu0
        %v552 = vadd.f32 0.0, %v551
        %553 = vmatprep.mubr.f32.mxu0 0.0
        %554 = vmatmul.mubr.f32.gmra.mrb[0].mxu0 %v445
        %v555 = vpop.f32.mrb[0].mxu0
        %v556 = vadd.f32 0.0, %v555
        %v557 = vpop.f32.mrb[0].mxu0
        %v558 = vadd.f32 0.0, %v557
        %559 = vdwg.mxu0
        %v560 = vmul.f32 %v514, %v410
        %v561 = vmul.f32 %v516, %v411
        %v562 = vmul.f32 %v520, %v412
        %v563 = vmul.f32 %v522, %v413
        %v564 = vmul.f32 %v526, %v410
        %v565 = vmul.f32 %v528, %v411
        %v566 = vmul.f32 %v532, %v412
        %v567 = vmul.f32 %v534, %v413
        %v568 = vmul.f32 %v538, %v410
        %v569 = vmul.f32 %v540, %v411
        %v570 = vmul.f32 %v544, %v412
        %v571 = vmul.f32 %v546, %v413
        %v572 = vmul.f32 %v550, %v410
        %v573 = vmul.f32 %v552, %v411
        %v574 = vmul.f32 %v556, %v412
        %v575 = vmul.f32 %v558, %v413
        %v576 = vadd.f32 %v560, %v562
        %v577 = vrot.slane %v576, 4
        %v578 = vadd.f32 %v576, %v577
        %v579 = vrot.slane %v578, 2
        %v580 = vadd.f32 %v578, %v579
        %v581 = vrot.slane %v580, 1
        %v582 = vadd.f32 %v580, %v581
        %v583 = vadd.f32 %v561, %v563
        %v584 = vrot.slane %v583, 4
        %v585 = vadd.f32 %v583, %v584
        %v586 = vrot.slane %v585, 2
        %v587 = vadd.f32 %v585, %v586
        %v588 = vrot.slane %v587, 1
        %v589 = vadd.f32 %v587, %v588
        %v590 = vadd.f32 %v564, %v566
        %v591 = vrot.slane %v590, 4
        %v592 = vadd.f32 %v590, %v591
        %v593 = vrot.slane %v592, 2
        %v594 = vadd.f32 %v592, %v593
        %v595 = vrot.slane %v594, 1
        %v596 = vadd.f32 %v594, %v595
        %v597 = vadd.f32 %v565, %v567
        %v598 = vrot.slane %v597, 4
        %v599 = vadd.f32 %v597, %v598
        %v600 = vrot.slane %v599, 2
        %v601 = vadd.f32 %v599, %v600
        %v602 = vrot.slane %v601, 1
        %v603 = vadd.f32 %v601, %v602
        %v604 = vadd.f32 %v568, %v570
        %v605 = vrot.slane %v604, 4
        %v606 = vadd.f32 %v604, %v605
        %v607 = vrot.slane %v606, 2
        %v608 = vadd.f32 %v606, %v607
        %v609 = vrot.slane %v608, 1
        %v610 = vadd.f32 %v608, %v609
        %v611 = vadd.f32 %v569, %v571
        %v612 = vrot.slane %v611, 4
        %v613 = vadd.f32 %v611, %v612
        %v614 = vrot.slane %v613, 2
        %v615 = vadd.f32 %v613, %v614
        %v616 = vrot.slane %v615, 1
        %v617 = vadd.f32 %v615, %v616
        %v618 = vadd.f32 %v572, %v574
        %v619 = vrot.slane %v618, 4
        %v620 = vadd.f32 %v618, %v619
        %v621 = vrot.slane %v620, 2
        %v622 = vadd.f32 %v620, %v621
        %v623 = vrot.slane %v622, 1
        %v624 = vadd.f32 %v622, %v623
        %v625 = vadd.f32 %v573, %v575
        %v626 = vrot.slane %v625, 4
        %v627 = vadd.f32 %v625, %v626
        %v628 = vrot.slane %v627, 2
        %v629 = vadd.f32 %v627, %v628
        %v630 = vrot.slane %v629, 1
        %v631 = vadd.f32 %v629, %v630
        %v640 = vcombine.low %v582, %v589
        %v641 = vcombine.low %v596, %v603
        %v642 = vcombine.low %v610, %v617
        %v643 = vcombine.low %v624, %v631
        %v644 = vrot.slane %v641, 7
        %vm645 = vcmask 1041409
        %v646 = vsel %vm645, %v644, %v640
        %vm647 = vcmask 1045509
        %v648 = vsel %vm647, %v644, %v646
        %v649 = vrot.slane %v642, 6
        %vm650 = vcmask 1042434
        %v651 = vsel %vm650, %v649, %v648
        %vm652 = vcmask 1046534
        %v653 = vsel %vm652, %v649, %v651
        %v654 = vrot.slane %v643, 5
        %vm655 = vcmask 1043459
        %v656 = vsel %vm655, %v654, %v653
        %vm657 = vcmask 1047559
        %v658 = vsel %vm657, %v654, %v656
        %660 = vst [vmem:[%s207] sm:$0xff] %v658
        %s661 = sand.u32 %s113, 1
        %s662 = scalar_lea.sflag [#allocation3], %s661
        %s663 = sand.u32 %s113, 1
        %s664 = smul.addr %s663, 8
        %s665 = scalar_lea.vmem [#allocation5], %s664
        // Predicated region
        $region37: #{tpu_custom_call.1} parent=31 // pred_check
          %p666 = pneg %p123
        $region38: #{tpu_custom_call.1} parent=31 // pred_check_branch
          %668 = sbr.rel (%p666) target = $region40
        $region39: #{tpu_custom_call.1} parent=31 // pred_region
          %s669 = smul.u32 2, %s23
          %s671 = ssub.s32 128, 128
          %672 = vsyncadd %s662, %s671
          %s673 = smul.addr %s22, 2
          %s674 = sadd.s32 %s669, %s673
          %s675 = smul.addr %s674, 64
          %s676 = scalar_lea.hbm %s3, %s675
          %s678 = sshll.u32 %s665, 4
          %s679 = int_to_ptr.vmem [resolvable:$true] %s678
          %681 = dma.vmem_to_hbm [thread:$0]  %s679, 128, %s676, %s662
        $region40: #{tpu_custom_call.1} parent=31 // pred_fallthru
          _
      $region32: #{tpu_custom_call.1} parent=5 // pred_fallthru
        _
      %p682 = scmp.le.s32.totalorder 2, %s13
      // Predicated region
      $region41: #{tpu_custom_call.1} parent=5 // pred_check
        %p683 = pneg %p682
      $region42: #{tpu_custom_call.1} parent=5 // pred_check_branch
        %685 = sbr.rel (%p683) target = $region44
      $region43: #{tpu_custom_call.1} parent=5 // pred_region
        %s686 = ssub.s32 %s13, 2
        // Predicated region
        $region45: #{tpu_custom_call.1} parent=43 // pred_check
          %p687 = pneg %p129
        $region46: #{tpu_custom_call.1} parent=43 // pred_check_branch
          %689 = sbr.rel (%p687) target = $region48
        $region47: #{tpu_custom_call.1} parent=43 // pred_region
          %s690 = sand.u32 %s114, 1
          %s691 = scalar_lea.sflag [#allocation3], %s690
          %s692 = sand.u32 %s114, 1
          %s693 = smul.addr %s692, 8
          %s694 = scalar_lea.vmem [#allocation5], %s693
          %695 = dma.done %s691, 128
        $region48: #{tpu_custom_call.1} parent=43 // pred_fallthru
          _
      $region44: #{tpu_custom_call.1} parent=5 // pred_fallthru
        _
    $region6: #{tpu_custom_call.1} parent=1 // loop_footer
      %s17 = sadd.s32 1, %s13
    $region7: #{tpu_custom_call.1} parent=1 // loop_footer_branch
      %12 = sbr.rel target = $region3
    $region8: #{tpu_custom_call.1} parent=1 // loop_exit
      _
    %696 = vsyncpa [#allocation3], 1
    %s697 = scalar_lea.sflag [#allocation3], 1
    %698 = vsyncpa %s697, 1
    %699 = vsyncpa [#allocation4], 1
    %s700 = scalar_lea.sflag [#allocation4], 1
    %701 = vsyncpa %s700, 1

</llo_original>
